<compile_context>
chip_gen: v7x
topology: tpu7x:2x2x1
jax: 0.10.0
libtpu: 0.0.40
codegen_flags: <defaults>
</compile_context>

<pallas_src>
import jax
import jax.numpy as jnp
from jax.experimental import pallas as pl
from jax.experimental.pallas import tpu as pltpu


def attention_kernel(hid_ref, enc_ref, w1_ref, b1_ref, w2_ref, o_ref):
    """One grid step handles an S-block of `s_blk` source positions.

    hid_ref: (B, E)             decoder hidden state (same for every s)
    enc_ref: (1, B*s_blk, E)    encoder rows, b-major within the block
    w1_ref:  (E, H)  b1_ref: (1, H)  w2_ref: (H, H)
    o_ref:   (1, 2B, s_blk, H)  softmax probs; channels 0..B-1 = hidden part,
                                B..2B-1 = encoder part (torch.cat dim=1 order).
    """
    B = hid_ref.shape[0]
    s_blk = o_ref.shape[2]

    w1 = w1_ref[...]
    b1 = b1_ref[...]
    w2 = w2_ref[...]

    # Hidden half: identical for every source position -> compute once per block.
    a_h = jnp.tanh(jnp.dot(hid_ref[...], w1, preferred_element_type=jnp.float32) + b1)
    sc_h = jnp.dot(a_h, w2, preferred_element_type=jnp.float32)            # (B, H)

    # Encoder half: one flat matmul over all rows of the block (MXU friendly).
    x_e = enc_ref[0]                                                       # (B*s_blk, E)
    a_e = jnp.tanh(jnp.dot(x_e, w1, preferred_element_type=jnp.float32) + b1)
    sc_e = jnp.dot(a_e, w2, preferred_element_type=jnp.float32)            # (B*s_blk, H)

    # Softmax over the concatenated-batch axis (PyTorch dim=1): for source
    # position j and feature h, reduce over the 2B scores
    #   {sc_h[b, h]}_{b<B}  U  {sc_e[b*s_blk + j, h]}_{b<B}
    m = jnp.full((s_blk, sc_h.shape[1]), -jnp.inf, dtype=jnp.float32)
    for b in range(B):                                   # B is a Python int -> unrolled
        m = jnp.maximum(m, sc_h[b:b + 1, :])             # (1,H) bcast vs (s_blk,H)
        m = jnp.maximum(m, sc_e[b * s_blk:(b + 1) * s_blk, :])

    e_h, e_e = [], []
    denom = jnp.zeros_like(m)
    for b in range(B):
        eh = jnp.exp(sc_h[b:b + 1, :] - m)                     # (s_blk, H)
        ee = jnp.exp(sc_e[b * s_blk:(b + 1) * s_blk, :] - m)   # (s_blk, H)
        e_h.append(eh)
        e_e.append(ee)
        denom = denom + eh + ee

    # EUP reciprocal + one Newton step: keeps the divide off the VPU while
    # restoring ~f32 accuracy.
    inv = pl.reciprocal(denom, approx=True)
    inv = inv * (2.0 - denom * inv)

    for b in range(B):
        o_ref[0, b] = e_h[b] * inv          # hidden part   (out rows 0..B-1)
        o_ref[0, B + b] = e_e[b] * inv      # encoder part  (out rows B..2B-1)


def attention_forward(hidden, encoder_outputs, w1_t, b1, w2_t, num_s_blocks=None):
    """hidden: [B, E]; encoder_outputs: [S, B, E].
    w1_t: [E, H] (transposed Linear weight), b1: [1, H], w2_t: [H, H]."""
    S, B, E = encoder_outputs.shape
    H = w1_t.shape[1]

    # >=2 grid steps lets v7x's two TensorCores split the work while keeping
    # each block's matmul a full multiple of 8 sublanes; for odd S use 1 block.
    if num_s_blocks is None:
        num_s_blocks = 2 if (S % 2 == 0 and S >= 2) else 1
    s_blk = S // num_s_blocks

    # Reorder encoder rows so each S-block is one contiguous, b-major 2D slab:
    #   row (b*s_blk + j) of block i  <->  encoder_outputs[i*s_blk + j, b, :].
    # No S-fold duplication of `hidden` and no concat is ever written to HBM.
    enc_r = encoder_outputs.reshape(num_s_blocks, s_blk, B, E)
    enc_r = jnp.transpose(enc_r, (0, 2, 1, 3)).reshape(num_s_blocks, B * s_blk, E)

    out_blocks = pl.pallas_call(
        attention_kernel,
        out_shape=jax.ShapeDtypeStruct((num_s_blocks, 2 * B, s_blk, H), jnp.float32),
        grid=(num_s_blocks,),
        in_specs=[
            pl.BlockSpec((B, E), lambda i: (0, 0)),              # hidden  (resident)
            pl.BlockSpec((1, B * s_blk, E), lambda i: (i, 0, 0)),
            pl.BlockSpec((E, H), lambda i: (0, 0)),              # W1      (resident)
            pl.BlockSpec((1, H), lambda i: (0, 0)),              # b1      (resident)
            pl.BlockSpec((H, H), lambda i: (0, 0)),              # W2      (resident)
        ],
        out_specs=pl.BlockSpec((1, 2 * B, s_blk, H), lambda i: (i, 0, 0, 0)),
        compiler_params=pltpu.CompilerParams(
            dimension_semantics=("parallel",)),
    )(hidden, enc_r, w1_t, b1, w2_t)

    # (nblk, 2B, s_blk, H) -> (S, 2B, H); tiny one-shot transpose in XLA.
    return jnp.transpose(out_blocks, (0, 2, 1, 3)).reshape(S, 2 * B, H)


def reference_forward(hidden, encoder_outputs, w1_t, b1, w2_t):
    S, B, E = encoder_outputs.shape
    hid_rep = jnp.broadcast_to(hidden[None, :, :], (S, B, E))
    x = jnp.concatenate([hid_rep, encoder_outputs], axis=1)
    a = jnp.tanh(x @ w1_t + b1[0])
    s = a @ w2_t
    return jax.nn.softmax(s, axis=1)


if __name__ == "__main__":
    # Small shapes consistent with the module's forward.
    S = 8                 # src_len (seq)
    B = 2                 # batch
    ENC = 32              # encoder_hidden_dim (== last dim of hidden & enc outputs)
    DEC = 32              # decoder_hidden_dim
    H = ENC + DEC         # 64

    key = jax.random.PRNGKey(0)
    k1, k2, k3, k4, k5 = jax.random.split(key, 5)

    # PyTorch Linear default init: U(-1/sqrt(fan_in), 1/sqrt(fan_in))
    bound1 = 1.0 / (ENC ** 0.5)
    w1 = jax.random.uniform(k1, (H, ENC), jnp.float32, -bound1, bound1)   # (out, in)
    b1 = jax.random.uniform(k2, (H,), jnp.float32, -bound1, bound1)
    bound2 = 1.0 / (H ** 0.5)
    w2 = jax.random.uniform(k3, (H, H), jnp.float32, -bound2, bound2)     # (out, in)

    # Inputs
    hidden = jax.random.normal(k4, (B, ENC), jnp.float32)
    encoder_outputs = jax.random.normal(k5, (S, B, ENC), jnp.float32)

    # Pre-transpose Linear weights to (in, out) for x @ W layout in the kernel.
    w1_t = w1.T                    # (ENC, H)
    b1_2d = b1[None, :]            # (1, H)
    w2_t = w2.T                    # (H, H)

    out = attention_forward(hidden, encoder_outputs, w1_t, b1_2d, w2_t)
    out = jax.block_until_ready(out)

    ref = reference_forward(hidden, encoder_outputs, w1_t, b1_2d, w2_t)
    assert out.shape == (S, 2 * B, H), out.shape
    # Slightly relaxed vs exact-divide reference because of the approximate
    # EUP reciprocal (Newton-refined) in the softmax denominator.
    assert jnp.allclose(out, ref, atol=1e-4, rtol=1e-4), "mismatch vs reference"

    print("KERNEL_OK")
</pallas_src>

<mosaic_0001>
module attributes {stable_mosaic.version = 11 : i64} {
  func.func @attention_kernel(%arg0: i32, %arg1: memref<2x32xf32, #tpu.memory_space<vmem>>, %arg2: memref<1x8x32xf32, #tpu.memory_space<vmem>>, %arg3: memref<32x64xf32, #tpu.memory_space<vmem>>, %arg4: memref<1x64xf32, #tpu.memory_space<vmem>>, %arg5: memref<64x64xf32, #tpu.memory_space<vmem>>, %arg6: memref<1x4x4x64xf32, #tpu.memory_space<vmem>>) attributes {dimension_semantics = [#tpu.dimension_semantics<parallel>], iteration_bounds = array<i64: 2>, scalar_prefetch = 0 : i64, scratch_operands = 0 : i64, tpu.core_type = #tpu.core_type<tc>, window_params = [{pipeline_mode = #tpu.pipeline_mode<synchronous>, transform_indices = @transform_0, window_bounds = array<i64: 2, 32>}, {transform_indices = @transform_1, window_bounds = array<i64: 1, 8, 32>}, {pipeline_mode = #tpu.pipeline_mode<synchronous>, transform_indices = @transform_2, window_bounds = array<i64: 32, 64>}, {pipeline_mode = #tpu.pipeline_mode<synchronous>, transform_indices = @transform_3, window_bounds = array<i64: 1, 64>}, {pipeline_mode = #tpu.pipeline_mode<synchronous>, transform_indices = @transform_4, window_bounds = array<i64: 64, 64>}, {transform_indices = @transform_5, window_bounds = array<i64: 1, 4, 4, 64>}]} {
    %c0 = arith.constant 0 : index
    %c0_0 = arith.constant 0 : index
    %0 = vector.load %arg3[%c0, %c0_0] : memref<32x64xf32, #tpu.memory_space<vmem>>, vector<32x64xf32>
    %c0_1 = arith.constant 0 : index
    %c0_2 = arith.constant 0 : index
    %1 = vector.load %arg4[%c0_1, %c0_2] : memref<1x64xf32, #tpu.memory_space<vmem>>, vector<1x64xf32>
    %c0_3 = arith.constant 0 : index
    %c0_4 = arith.constant 0 : index
    %2 = vector.load %arg5[%c0_3, %c0_4] : memref<64x64xf32, #tpu.memory_space<vmem>>, vector<64x64xf32>
    %c0_5 = arith.constant 0 : index
    %c0_6 = arith.constant 0 : index
    %3 = vector.load %arg1[%c0_5, %c0_6] : memref<2x32xf32, #tpu.memory_space<vmem>>, vector<2x32xf32>
    %cst = arith.constant dense<0.000000e+00> : vector<2x64xf32>
    %4 = tpu.matmul %3, %0, %cst {dimension_numbers = #tpu.dot_dimension_numbers<[1], [0], [0], [1], [0, 0, 1, 1], [], []>} : vector<2x32xf32>, vector<32x64xf32>, vector<2x64xf32> -> vector<2x64xf32>
    %5 = vector.broadcast %1 : vector<1x64xf32> to vector<2x64xf32>
    %6 = arith.addf %4, %5 : vector<2x64xf32>
    %7 = math.tanh %6 : vector<2x64xf32>
    %cst_7 = arith.constant dense<0.000000e+00> : vector<2x64xf32>
    %8 = tpu.matmul %7, %2, %cst_7 {dimension_numbers = #tpu.dot_dimension_numbers<[1], [0], [0], [1], [0, 0, 1, 1], [], []>} : vector<2x64xf32>, vector<64x64xf32>, vector<2x64xf32> -> vector<2x64xf32>
    %c0_8 = arith.constant 0 : index
    %c0_9 = arith.constant 0 : index
    %c0_10 = arith.constant 0 : index
    %9 = vector.load %arg2[%c0_8, %c0_9, %c0_10] : memref<1x8x32xf32, #tpu.memory_space<vmem>>, vector<1x8x32xf32>
    %10 = vector.shape_cast %9 : vector<1x8x32xf32> to vector<8x32xf32>
    %cst_11 = arith.constant dense<0.000000e+00> : vector<8x64xf32>
    %11 = tpu.matmul %10, %0, %cst_11 {dimension_numbers = #tpu.dot_dimension_numbers<[1], [0], [0], [1], [0, 0, 1, 1], [], []>} : vector<8x32xf32>, vector<32x64xf32>, vector<8x64xf32> -> vector<8x64xf32>
    %12 = vector.broadcast %1 : vector<1x64xf32> to vector<8x64xf32>
    %13 = arith.addf %11, %12 : vector<8x64xf32>
    %14 = math.tanh %13 : vector<8x64xf32>
    %cst_12 = arith.constant dense<0.000000e+00> : vector<8x64xf32>
    %15 = tpu.matmul %14, %2, %cst_12 {dimension_numbers = #tpu.dot_dimension_numbers<[1], [0], [0], [1], [0, 0, 1, 1], [], []>} : vector<8x64xf32>, vector<64x64xf32>, vector<8x64xf32> -> vector<8x64xf32>
    %cst_13 = arith.constant 0xFF800000 : f32
    %16 = vector.broadcast %cst_13 : f32 to vector<4x64xf32>
    %17 = vector.extract_strided_slice %8 {offsets = [0, 0], sizes = [1, 64], strides = [1, 1]} : vector<2x64xf32> to vector<1x64xf32>
    %18 = vector.broadcast %17 : vector<1x64xf32> to vector<4x64xf32>
    %19 = arith.maximumf %16, %18 : vector<4x64xf32>
    %20 = vector.extract_strided_slice %15 {offsets = [0, 0], sizes = [4, 64], strides = [1, 1]} : vector<8x64xf32> to vector<4x64xf32>
    %21 = arith.maximumf %19, %20 : vector<4x64xf32>
    %22 = vector.extract_strided_slice %8 {offsets = [1, 0], sizes = [1, 64], strides = [1, 1]} : vector<2x64xf32> to vector<1x64xf32>
    %23 = vector.broadcast %22 : vector<1x64xf32> to vector<4x64xf32>
    %24 = arith.maximumf %21, %23 : vector<4x64xf32>
    %25 = vector.extract_strided_slice %15 {offsets = [4, 0], sizes = [4, 64], strides = [1, 1]} : vector<8x64xf32> to vector<4x64xf32>
    %26 = arith.maximumf %24, %25 : vector<4x64xf32>
    %cst_14 = arith.constant 0.000000e+00 : f32
    %27 = vector.broadcast %cst_14 : f32 to vector<4x64xf32>
    %28 = vector.extract_strided_slice %8 {offsets = [0, 0], sizes = [1, 64], strides = [1, 1]} : vector<2x64xf32> to vector<1x64xf32>
    %29 = vector.broadcast %28 : vector<1x64xf32> to vector<4x64xf32>
    %30 = arith.subf %29, %26 : vector<4x64xf32>
    %31 = math.exp %30 : vector<4x64xf32>
    %32 = vector.extract_strided_slice %15 {offsets = [0, 0], sizes = [4, 64], strides = [1, 1]} : vector<8x64xf32> to vector<4x64xf32>
    %33 = arith.subf %32, %26 : vector<4x64xf32>
    %34 = math.exp %33 : vector<4x64xf32>
    %35 = arith.addf %27, %31 : vector<4x64xf32>
    %36 = arith.addf %35, %34 : vector<4x64xf32>
    %37 = vector.extract_strided_slice %8 {offsets = [1, 0], sizes = [1, 64], strides = [1, 1]} : vector<2x64xf32> to vector<1x64xf32>
    %38 = vector.broadcast %37 : vector<1x64xf32> to vector<4x64xf32>
    %39 = arith.subf %38, %26 : vector<4x64xf32>
    %40 = math.exp %39 : vector<4x64xf32>
    %41 = vector.extract_strided_slice %15 {offsets = [4, 0], sizes = [4, 64], strides = [1, 1]} : vector<8x64xf32> to vector<4x64xf32>
    %42 = arith.subf %41, %26 : vector<4x64xf32>
    %43 = math.exp %42 : vector<4x64xf32>
    %44 = arith.addf %36, %40 : vector<4x64xf32>
    %45 = arith.addf %44, %43 : vector<4x64xf32>
    %46 = tpu.reciprocal %45 {approx = true} : vector<4x64xf32> -> vector<4x64xf32>
    %47 = arith.mulf %45, %46 : vector<4x64xf32>
    %cst_15 = arith.constant 2.000000e+00 : f32
    %48 = vector.broadcast %cst_15 : f32 to vector<4x64xf32>
    %49 = arith.subf %48, %47 : vector<4x64xf32>
    %50 = arith.mulf %46, %49 : vector<4x64xf32>
    %51 = arith.mulf %31, %50 : vector<4x64xf32>
    %c0_16 = arith.constant 0 : index
    %c0_17 = arith.constant 0 : index
    %c0_18 = arith.constant 0 : index
    %c0_19 = arith.constant 0 : index
    %52 = vector.load %arg6[%c0_16, %c0_17, %c0_18, %c0_19] : memref<1x4x4x64xf32, #tpu.memory_space<vmem>>, vector<1x1x4x64xf32>
    %53 = vector.shape_cast %52 : vector<1x1x4x64xf32> to vector<4x64xf32>
    %54 = vector.shape_cast %51 : vector<4x64xf32> to vector<1x1x4x64xf32>
    tpu.vector_store %arg6[%c0_16, %c0_17, %c0_18, %c0_19], %54 {strides = array<i32>} : memref<1x4x4x64xf32, #tpu.memory_space<vmem>>, vector<1x1x4x64xf32>,
    %55 = arith.mulf %34, %50 : vector<4x64xf32>
    %c0_20 = arith.constant 0 : index
    %c2 = arith.constant 2 : index
    %c0_21 = arith.constant 0 : index
    %c0_22 = arith.constant 0 : index
    %56 = vector.load %arg6[%c0_20, %c2, %c0_21, %c0_22] : memref<1x4x4x64xf32, #tpu.memory_space<vmem>>, vector<1x1x4x64xf32>
    %57 = vector.shape_cast %56 : vector<1x1x4x64xf32> to vector<4x64xf32>
    %58 = vector.shape_cast %55 : vector<4x64xf32> to vector<1x1x4x64xf32>
    tpu.vector_store %arg6[%c0_20, %c2, %c0_21, %c0_22], %58 {strides = array<i32>} : memref<1x4x4x64xf32, #tpu.memory_space<vmem>>, vector<1x1x4x64xf32>,
    %59 = arith.mulf %40, %50 : vector<4x64xf32>
    %c0_23 = arith.constant 0 : index
    %c1 = arith.constant 1 : index
    %c0_24 = arith.constant 0 : index
    %c0_25 = arith.constant 0 : index
    %60 = vector.load %arg6[%c0_23, %c1, %c0_24, %c0_25] : memref<1x4x4x64xf32, #tpu.memory_space<vmem>>, vector<1x1x4x64xf32>
    %61 = vector.shape_cast %60 : vector<1x1x4x64xf32> to vector<4x64xf32>
    %62 = vector.shape_cast %59 : vector<4x64xf32> to vector<1x1x4x64xf32>
    tpu.vector_store %arg6[%c0_23, %c1, %c0_24, %c0_25], %62 {strides = array<i32>} : memref<1x4x4x64xf32, #tpu.memory_space<vmem>>, vector<1x1x4x64xf32>,
    %63 = arith.mulf %43, %50 : vector<4x64xf32>
    %c0_26 = arith.constant 0 : index
    %c3 = arith.constant 3 : index
    %c0_27 = arith.constant 0 : index
    %c0_28 = arith.constant 0 : index
    %64 = vector.load %arg6[%c0_26, %c3, %c0_27, %c0_28] : memref<1x4x4x64xf32, #tpu.memory_space<vmem>>, vector<1x1x4x64xf32>
    %65 = vector.shape_cast %64 : vector<1x1x4x64xf32> to vector<4x64xf32>
    %66 = vector.shape_cast %63 : vector<4x64xf32> to vector<1x1x4x64xf32>
    tpu.vector_store %arg6[%c0_26, %c3, %c0_27, %c0_28], %66 {strides = array<i32>} : memref<1x4x4x64xf32, #tpu.memory_space<vmem>>, vector<1x1x4x64xf32>,
    return
  }
  func.func @transform_0(%arg0: i32) -> (i32, i32) {
    %c0_i32 = arith.constant 0 : i32
    %c0_i32_0 = arith.constant 0 : i32
    %c0_i32_1 = arith.constant 0 : i32
    return %c0_i32, %c0_i32_0 : i32, i32
  }
  func.func @transform_1(%arg0: i32) -> (i32, i32, i32) {
    %c0_i32 = arith.constant 0 : i32
    %c0_i32_0 = arith.constant 0 : i32
    %c0_i32_1 = arith.constant 0 : i32
    return %arg0, %c0_i32, %c0_i32_0 : i32, i32, i32
  }
  func.func @transform_2(%arg0: i32) -> (i32, i32) {
    %c0_i32 = arith.constant 0 : i32
    %c0_i32_0 = arith.constant 0 : i32
    %c0_i32_1 = arith.constant 0 : i32
    return %c0_i32, %c0_i32_0 : i32, i32
  }
  func.func @transform_3(%arg0: i32) -> (i32, i32) {
    %c0_i32 = arith.constant 0 : i32
    %c0_i32_0 = arith.constant 0 : i32
    %c0_i32_1 = arith.constant 0 : i32
    return %c0_i32, %c0_i32_0 : i32, i32
  }
  func.func @transform_4(%arg0: i32) -> (i32, i32) {
    %c0_i32 = arith.constant 0 : i32
    %c0_i32_0 = arith.constant 0 : i32
    %c0_i32_1 = arith.constant 0 : i32
    return %c0_i32, %c0_i32_0 : i32, i32
  }
  func.func @transform_5(%arg0: i32) -> (i32, i32, i32, i32) {
    %c0_i32 = arith.constant 0 : i32
    %c0_i32_0 = arith.constant 0 : i32
    %c0_i32_1 = arith.constant 0 : i32
    %c0_i32_2 = arith.constant 0 : i32
    return %arg0, %c0_i32, %c0_i32_0, %c0_i32_1 : i32, i32, i32, i32
  }
}

</mosaic_0001>

<llo_original>
// kernel: tpu_custom_call.1
$region0: #{tpu_custom_call.1}
  #allocation0 [shape = 'u32[]', space=smem, size = 0x4, offset = 0x4, fixed_abs, tag = 'smem constant byte address 0x4 - core index']
  #allocation1 [shape = 'u32[144,128]{1,0:T(1,128)}', space=vmem, size = 0x12000, scoped, tag = 'internal scratch']
  %s0 = inlined_call_operand.hbm [shape: f32[2,32], index: 0, kind: input, shape index: {}]
  %s1 = inlined_call_operand.hbm [shape: f32[2,8,32], index: 1, kind: input, shape index: {}]
  %s2 = inlined_call_operand.hbm [shape: f32[32,64], index: 2, kind: input, shape index: {}]
  %s3 = inlined_call_operand.vmem [shape: f32[1,64], index: 3, kind: input, shape index: {}]
  %s4 = inlined_call_operand.hbm [shape: f32[64,64], index: 4, kind: input, shape index: {}]
  %s5 = inlined_call_operand.hbm [shape: f32[2,4,4,64], index: 5, kind: output, shape index: {}]
  %s6 = sld [smem:[#allocation0]]
  $region69: #{tpu_custom_call.1} parent=0
    _
  %s8 = ssub.s32 1, %s6
  %s9 = scalar_select 0, %s8, %s6
  $region1: #{tpu_custom_call.1} parent=0
    #allocation2 [shape = 'u8[1024]{0}', space=vmem, size = 0x400, scoped, tag = 'input window, operand 0, single buffered']
    #allocation3 [shape = 's32[2]{0}', space=sflag, size = 0x8, scoped, tag = 'scoped memory for tpu_custom_call.1']
    #allocation4 [shape = 's32[2]{0}', space=sflag, size = 0x8, scoped, tag = 'scoped memory for tpu_custom_call.1']
    #allocation5 [shape = 'u8[8192]{0}', space=vmem, size = 0x2000, scoped, tag = 'input window, operand 1']
    #allocation6 [shape = 's32[2]{0}', space=sflag, size = 0x8, scoped, tag = 'scoped memory for tpu_custom_call.1']
    #allocation7 [shape = 'u8[16384]{0}', space=vmem, size = 0x4000, scoped, tag = 'input window, operand 2, single buffered']
    #allocation8 [shape = 'u8[32768]{0}', space=vmem, size = 0x8000, scoped, tag = 'input window, operand 4, single buffered']
    #allocation9 [shape = 's32[1]{0}', space=sflag, size = 0x4, scoped, tag = 'scoped memory for tpu_custom_call.1']
    #allocation10 [shape = 'u8[16384]{0}', space=vmem, size = 0x4000, scoped, tag = 'output window, operand 0']
    %10 = vsyncpa [#allocation3], 0
    %11 = vsyncpa [#allocation6], 0
    %s12 = scalar_lea.sflag [#allocation6], 1
    %13 = vsyncpa %s12, 0
    %14 = vsyncpa [#allocation9], 0
    %15 = vsyncpa [#allocation4], 0
    %s16 = scalar_lea.sflag [#allocation4], 1
    %17 = vsyncpa %s16, 0
    loop: start=0, step=1, limit=4
    $region2: #{tpu_custom_call.1} parent=1 // loop_pre_header
      _
    $region3: #{tpu_custom_call.1} parent=1 // loop_header
      %s19 = sphi 0, %s23
      %p20 = scmp.ge.s32.totalorder %s19, 4
      %s27 = sphi 0, %s27
      %s29 = sphi 0, %s27
      %s30 = sphi 0, %s29
      %s44 = sphi 0, %s30
      %s50 = sphi 0, %s52
      %s53 = sphi 0, %s50
      %s54 = sphi 0, %s53
      %s70 = sphi 0, %s54
      %s74 = sphi 0, %s74
      %s76 = sphi 0, %s74
      %s77 = sphi 0, %s76
      %s91 = sphi 0, %s77
      %s95 = sphi 0, %s95
      %s97 = sphi 0, %s95
      %s98 = sphi 0, %s97
      %s112 = sphi 0, %s98
      %s116 = sphi 0, %s116
      %s118 = sphi 0, %s116
      %s119 = sphi 0, %s118
      %s133 = sphi 0, %s119
      %s139 = sphi 0, %s141
      %s142 = sphi 0, %s139
      %s143 = sphi 0, %s142
      %s159 = sphi 0, %s143
    $region4: #{tpu_custom_call.1} parent=1 // loop_header_branch
      %22 = sbr.rel (%p20) target = $region8
    $region5: #{tpu_custom_call.1} parent=1 // loop_body
      %s24 = ssub.s32 %s19, 1
      %s25 = ssub.s32 %s19, 2
      %s26 = sadd.s32 %s19, 1
      %s28 = sadd.s32 %s27, 1
      %p31 = scmp.eq.s32.totalorder %s19, 1
      %p32 = scmp.ne.s32.totalorder %s27, %s29
      %p33 = scmp.eq.s32.totalorder %s19, 0
      %p34 = por %p32, %p33
      %p35 = scmp.ne.s32.totalorder %s27, %s29
      %p36 = scmp.eq.s32.totalorder %s24, 1
      %p37 = por %p35, %p36
      %p38 = scmp.ne.s32.totalorder %s29, %s30
      %p39 = scmp.eq.s32.totalorder %s24, 0
      %p40 = por %p38, %p39
      %p41 = scmp.ne.s32.totalorder %s29, %s30
      %p42 = scmp.eq.s32.totalorder %s25, 1
      %p43 = por %p41, %p42
      %p45 = scmp.ne.s32.totalorder %s30, %s44
      %p46 = scmp.eq.s32.totalorder %s25, 0
      %p47 = por %p45, %p46
      %s48 = ssub.s32 %s19, %s26
      %p49 = scmp.eq.s32.totalorder %s48, 0
      %s51 = sadd.s32 %s50, 1
      %s52 = scalar_select %p49, %s50, %s51
      %p55 = pneg %p49
      %p56 = scmp.eq.s32.totalorder %s19, 1
      %p57 = por %p55, %p56
      %p58 = scmp.ne.s32.totalorder %s50, %s53
      %p59 = scmp.eq.s32.totalorder %s19, 0
      %p60 = por %p58, %p59
      %p61 = scmp.ne.s32.totalorder %s50, %s53
      %p62 = scmp.eq.s32.totalorder %s24, 1
      %p63 = por %p61, %p62
      %p64 = scmp.ne.s32.totalorder %s53, %s54
      %p65 = scmp.eq.s32.totalorder %s24, 0
      %p66 = por %p64, %p65
      %p67 = scmp.ne.s32.totalorder %s53, %s54
      %p68 = scmp.eq.s32.totalorder %s25, 1
      %p69 = por %p67, %p68
      %p71 = scmp.ne.s32.totalorder %s54, %s70
      %p72 = scmp.eq.s32.totalorder %s25, 0
      %p73 = por %p71, %p72
      %s75 = sadd.s32 %s74, 1
      %p78 = scmp.eq.s32.totalorder %s19, 1
      %p79 = scmp.ne.s32.totalorder %s74, %s76
      %p80 = scmp.eq.s32.totalorder %s19, 0
      %p81 = por %p79, %p80
      %p82 = scmp.ne.s32.totalorder %s74, %s76
      %p83 = scmp.eq.s32.totalorder %s24, 1
      %p84 = por %p82, %p83
      %p85 = scmp.ne.s32.totalorder %s76, %s77
      %p86 = scmp.eq.s32.totalorder %s24, 0
      %p87 = por %p85, %p86
      %p88 = scmp.ne.s32.totalorder %s76, %s77
      %p89 = scmp.eq.s32.totalorder %s25, 1
      %p90 = por %p88, %p89
      %p92 = scmp.ne.s32.totalorder %s77, %s91
      %p93 = scmp.eq.s32.totalorder %s25, 0
      %p94 = por %p92, %p93
      %s96 = sadd.s32 %s95, 1
      %p99 = scmp.eq.s32.totalorder %s19, 1
      %p100 = scmp.ne.s32.totalorder %s95, %s97
      %p101 = scmp.eq.s32.totalorder %s19, 0
      %p102 = por %p100, %p101
      %p103 = scmp.ne.s32.totalorder %s95, %s97
      %p104 = scmp.eq.s32.totalorder %s24, 1
      %p105 = por %p103, %p104
      %p106 = scmp.ne.s32.totalorder %s97, %s98
      %p107 = scmp.eq.s32.totalorder %s24, 0
      %p108 = por %p106, %p107
      %p109 = scmp.ne.s32.totalorder %s97, %s98
      %p110 = scmp.eq.s32.totalorder %s25, 1
      %p111 = por %p109, %p110
      %p113 = scmp.ne.s32.totalorder %s98, %s112
      %p114 = scmp.eq.s32.totalorder %s25, 0
      %p115 = por %p113, %p114
      %s117 = sadd.s32 %s116, 1
      %p120 = scmp.eq.s32.totalorder %s19, 1
      %p121 = scmp.ne.s32.totalorder %s116, %s118
      %p122 = scmp.eq.s32.totalorder %s19, 0
      %p123 = por %p121, %p122
      %p124 = scmp.ne.s32.totalorder %s116, %s118
      %p125 = scmp.eq.s32.totalorder %s24, 1
      %p126 = por %p124, %p125
      %p127 = scmp.ne.s32.totalorder %s118, %s119
      %p128 = scmp.eq.s32.totalorder %s24, 0
      %p129 = por %p127, %p128
      %p130 = scmp.ne.s32.totalorder %s118, %s119
      %p131 = scmp.eq.s32.totalorder %s25, 1
      %p132 = por %p130, %p131
      %p134 = scmp.ne.s32.totalorder %s119, %s133
      %p135 = scmp.eq.s32.totalorder %s25, 0
      %p136 = por %p134, %p135
      %s137 = ssub.s32 %s19, %s26
      %p138 = scmp.eq.s32.totalorder %s137, 0
      %s140 = sadd.s32 %s139, 1
      %s141 = scalar_select %p138, %s139, %s140
      %p144 = pneg %p138
      %p145 = scmp.eq.s32.totalorder %s19, 1
      %p146 = por %p144, %p145
      %p147 = scmp.ne.s32.totalorder %s139, %s142
      %p148 = scmp.eq.s32.totalorder %s19, 0
      %p149 = por %p147, %p148
      %p150 = scmp.ne.s32.totalorder %s139, %s142
      %p151 = scmp.eq.s32.totalorder %s24, 1
      %p152 = por %p150, %p151
      %p153 = scmp.ne.s32.totalorder %s142, %s143
      %p154 = scmp.eq.s32.totalorder %s24, 0
      %p155 = por %p153, %p154
      %p156 = scmp.ne.s32.totalorder %s142, %s143
      %p157 = scmp.eq.s32.totalorder %s25, 1
      %p158 = por %p156, %p157
      %p160 = scmp.ne.s32.totalorder %s143, %s159
      %p161 = scmp.eq.s32.totalorder %s25, 0
      %p162 = por %p160, %p161
      %p163 = scmp.le.s32.totalorder 1, %s19
      %p164 = scmp.lt.s32.totalorder %s19, 3
      %p165 = pnand %p163, %p164
      %p166 = pneg %p165
      // Predicated region
      $region9: #{tpu_custom_call.1} parent=5 // pred_check
        _
      $region10: #{tpu_custom_call.1} parent=5 // pred_check_branch
        %168 = sbr.rel (%p165) target = $region12
      $region11: #{tpu_custom_call.1} parent=5 // pred_region
        %s169 = ssub.s32 %s19, 1
        // Predicated region
        $region13: #{tpu_custom_call.1} parent=11 // pred_check
          %p170 = pneg %p40
        $region14: #{tpu_custom_call.1} parent=11 // pred_check_branch
          %172 = sbr.rel (%p170) target = $region16
        $region15: #{tpu_custom_call.1} parent=11 // pred_region
          %s174 = ssub.s32 32, 32
          %175 = vsyncadd [#allocation3], %s174
          %s177 = sshll.u32 [#allocation2], 4
          %s178 = int_to_ptr.vmem [resolvable:$true] %s177
          %180 = dma.hbm_to_vmem [thread:$0]  %s0, 32, %s178, [#allocation3]
        $region16: #{tpu_custom_call.1} parent=11 // pred_fallthru
          _
        // Predicated region
        $region17: #{tpu_custom_call.1} parent=11 // pred_check
          %p181 = pneg %p87
        $region18: #{tpu_custom_call.1} parent=11 // pred_check_branch
          %183 = sbr.rel (%p181) target = $region20
        $region19: #{tpu_custom_call.1} parent=11 // pred_region
          %s185 = ssub.s32 512, 512
          %186 = vsyncadd [#allocation6], %s185
          %s187 = sshll.u32 [#allocation7], 4
          %s188 = int_to_ptr.vmem [resolvable:$true] %s187
          %193 = dma.hbm_to_vmem [thread:$0]  %s2, 512, %s188, [#allocation6], 128, 128, 8
        $region20: #{tpu_custom_call.1} parent=11 // pred_fallthru
          _
        // Predicated region
        $region21: #{tpu_custom_call.1} parent=11 // pred_check
          %p194 = pneg %p108
        $region22: #{tpu_custom_call.1} parent=11 // pred_check_branch
          %196 = sbr.rel (%p194) target = $region24
        $region23: #{tpu_custom_call.1} parent=11 // pred_region
          _
        $region24: #{tpu_custom_call.1} parent=11 // pred_fallthru
          _
        // Predicated region
        $region25: #{tpu_custom_call.1} parent=11 // pred_check
          %p197 = pneg %p129
        $region26: #{tpu_custom_call.1} parent=11 // pred_check_branch
          %199 = sbr.rel (%p197) target = $region28
        $region27: #{tpu_custom_call.1} parent=11 // pred_region
          %s201 = ssub.s32 1024, 1024
          %202 = vsyncadd [#allocation9], %s201
          %s203 = sshll.u32 [#allocation8], 4
          %s204 = int_to_ptr.vmem [resolvable:$true] %s203
          %209 = dma.hbm_to_vmem [thread:$0]  %s4, 1024, %s204, [#allocation9], 128, 128, 8
        $region28: #{tpu_custom_call.1} parent=11 // pred_fallthru
          _
      $region12: #{tpu_custom_call.1} parent=5 // pred_fallthru
        _
      %p210 = scmp.lt.s32.totalorder %s19, 2
      // Predicated region
      $region29: #{tpu_custom_call.1} parent=5 // pred_check
        %p211 = pneg %p210
      $region30: #{tpu_custom_call.1} parent=5 // pred_check_branch
        %213 = sbr.rel (%p211) target = $region32
      $region31: #{tpu_custom_call.1} parent=5 // pred_region
        // Predicated region
        $region33: #{tpu_custom_call.1} parent=31 // pred_check
          %p214 = pneg %p60
        $region34: #{tpu_custom_call.1} parent=31 // pred_check_branch
          %216 = sbr.rel (%p214) target = $region36
        $region35: #{tpu_custom_call.1} parent=31 // pred_region
          %s217 = sand.u32 %s19, 1
          %s218 = scalar_lea.sflag [#allocation6], %s217
          %s219 = sand.u32 %s50, 1
          %s220 = smul.addr %s219, 8
          %s221 = scalar_lea.vmem [#allocation5], %s220
          %s223 = ssub.s32 128, 128
          %224 = vsyncadd %s218, %s223
          %s225 = smul.addr %s19, 128
          %s226 = scalar_lea.hbm %s1, %s225
          %s228 = sshll.u32 %s221, 4
          %s229 = int_to_ptr.vmem [resolvable:$true] %s228
          %231 = dma.hbm_to_vmem [thread:$0]  %s226, 128, %s229, %s218
        $region36: #{tpu_custom_call.1} parent=31 // pred_fallthru
          _
      $region32: #{tpu_custom_call.1} parent=5 // pred_fallthru
        _
      %p232 = scmp.le.s32.totalorder 1, %s19
      %p233 = scmp.lt.s32.totalorder %s19, 3
      %p234 = pnand %p232, %p233
      %p235 = pneg %p234
      // Predicated region
      $region37: #{tpu_custom_call.1} parent=5 // pred_check
        _
      $region38: #{tpu_custom_call.1} parent=5 // pred_check_branch
        %237 = sbr.rel (%p234) target = $region40
      $region39: #{tpu_custom_call.1} parent=5 // pred_region
        %s238 = ssub.s32 %s19, 1
        // Predicated region
        $region41: #{tpu_custom_call.1} parent=39 // pred_check
          %p239 = pneg %p40
        $region42: #{tpu_custom_call.1} parent=39 // pred_check_branch
          %241 = sbr.rel (%p239) target = $region44
        $region43: #{tpu_custom_call.1} parent=39 // pred_region
          %242 = dma.done [#allocation3], 32
        $region44: #{tpu_custom_call.1} parent=39 // pred_fallthru
          _
        %s243 = sand.u32 %s24, 1
        %s244 = scalar_lea.sflag [#allocation6], %s243
        %s245 = sand.u32 %s53, 1
        %s246 = smul.addr %s245, 8
        %s247 = scalar_lea.vmem [#allocation5], %s246
        // Predicated region
        $region45: #{tpu_custom_call.1} parent=39 // pred_check
          %p248 = pneg %p66
        $region46: #{tpu_custom_call.1} parent=39 // pred_check_branch
          %250 = sbr.rel (%p248) target = $region48
        $region47: #{tpu_custom_call.1} parent=39 // pred_region
          %251 = dma.done %s244, 128
        $region48: #{tpu_custom_call.1} parent=39 // pred_fallthru
          _
        // Predicated region
        $region49: #{tpu_custom_call.1} parent=39 // pred_check
          %p252 = pneg %p87
        $region50: #{tpu_custom_call.1} parent=39 // pred_check_branch
          %254 = sbr.rel (%p252) target = $region52
        $region51: #{tpu_custom_call.1} parent=39 // pred_region
          %255 = dma.done [#allocation6], 512
        $region52: #{tpu_custom_call.1} parent=39 // pred_fallthru
          _
        // Predicated region
        $region53: #{tpu_custom_call.1} parent=39 // pred_check
          %p256 = pneg %p129
        $region54: #{tpu_custom_call.1} parent=39 // pred_check_branch
          %258 = sbr.rel (%p256) target = $region56
        $region55: #{tpu_custom_call.1} parent=39 // pred_region
          %259 = dma.done [#allocation9], 1024
        $region56: #{tpu_custom_call.1} parent=39 // pred_fallthru
          _
        %p260 = pneg %p40
        %p261 = pneg %p37
        %s262 = sand.u32 %s24, 1
        %s263 = scalar_lea.sflag [#allocation6], %s262
        %s264 = sand.u32 %s53, 1
        %s265 = smul.addr %s264, 8
        %s266 = scalar_lea.vmem [#allocation5], %s265
        %p267 = pneg %p66
        %p268 = pneg %p63
        %p269 = pneg %p87
        %p270 = pneg %p84
        %p271 = pneg %p108
        %p272 = pneg %p105
        %p273 = pneg %p129
        %p274 = pneg %p126
        %p275 = pneg %p155
        %p276 = pneg %p152
        %s277 = sand.u32 %s142, 1
        %s278 = scalar_lea.sflag [#allocation4], %s277
        %s279 = sand.u32 %s142, 1
        %s280 = smul.addr %s279, 16
        %s281 = scalar_lea.vmem [#allocation10], %s280
        %v282 = vld [vmem:[#allocation7] sm:$0xff]
        %v283 = vld [vmem:[#allocation7 + $0x8] sm:$0xff]
        %v284 = vld [vmem:[#allocation7 + $0x10] sm:$0xff]
        %v285 = vld [vmem:[#allocation7 + $0x18] sm:$0xff]
        %v286 = vld [vmem:[%s3] sm:$0x1]
        %v287 = vld [vmem:[#allocation8] sm:$0xff]
        %v288 = vld [vmem:[#allocation8 + $0x8] sm:$0xff]
        %v289 = vld [vmem:[#allocation8 + $0x10] sm:$0xff]
        %v290 = vld [vmem:[#allocation8 + $0x18] sm:$0xff]
        %v291 = vld [vmem:[#allocation8 + $0x20] sm:$0xff]
        %v292 = vld [vmem:[#allocation8 + $0x28] sm:$0xff]
        %v293 = vld [vmem:[#allocation8 + $0x30] sm:$0xff]
        %v294 = vld [vmem:[#allocation8 + $0x38] sm:$0xff]
        %v295 = vld [vmem:[#allocation2] sm:$0x3]
        %v297 = vlaneseq
        %v298 = vshrl.u32 %v297, 7
        %v299 = vsub.s32 0, %v298
        %v300 = vrot.slane %v286, %v299
        %vm302 = vcmask 261120
        %v304 = vsel %vm302, %v295, 0
        %306 = vmatprep.subr.mxu0 0.0
        %307 = vmatpush1.msra.mxu0 %v282
        %308 = vmatprep.subr.mxu0 0.0
        %309 = vmatpush1.msra.mxu0 %v283
        %310 = vmatprep.subr.mxu0 0.0
        %311 = vmatpush1.msra.mxu0 %v284
        %312 = vmatprep.subr.mxu0 0.0
        %313 = vmatpush1.msra.mxu0 %v285
        %314 = vmatprep.subr.mxu0 0.0
        %315 = vmatpush1.msra.mxu0 0.0
        %316 = vmatprep.subr.mxu0 0.0
        %317 = vmatpush1.msra.mxu0 0.0
        %318 = vmatprep.subr.mxu0 0.0
        %319 = vmatpush1.msra.mxu0 0.0
        %320 = vmatprep.subr.mxu0 0.0
        %321 = vmatpush1.msra.mxu0 0.0
        %322 = vmatprep.subr.mxu0 0.0
        %323 = vmatpush1.msra.mxu0 0.0
        %324 = vmatprep.subr.mxu0 0.0
        %325 = vmatpush1.msra.mxu0 0.0
        %326 = vmatprep.subr.mxu0 0.0
        %327 = vmatpush1.msra.mxu0 0.0
        %328 = vmatprep.subr.mxu0 0.0
        %329 = vmatpush1.msra.mxu0 0.0
        %330 = vmatprep.subr.mxu0 0.0
        %331 = vmatpush1.msra.mxu0 0.0
        %332 = vmatprep.subr.mxu0 0.0
        %333 = vmatpush1.msra.mxu0 0.0
        %334 = vmatprep.subr.mxu0 0.0
        %335 = vmatpush1.msra.mxu0 0.0
        %336 = vmatprep.subr.mxu0 0.0
        %337 = vmatpush1.msra.mxu0 0.0
        %338 = vmatprep.subr.mxu0 0.0
        %339 = vmatpush1.msra.mxu0 0.0
        %340 = vmatprep.subr.mxu0 0.0
        %341 = vmatpush1.msra.mxu0 0.0
        %342 = vmatprep.subr.mxu0 0.0
        %343 = vmatpush1.msra.mxu0 0.0
        %344 = vmatprep.subr.mxu0 0.0
        %345 = vmatpush1.msra.mxu0 0.0
        %346 = vmatprep.subr.mxu0 0.0
        %347 = vmatpush1.msra.mxu0 0.0
        %348 = vmatprep.subr.mxu0 0.0
        %349 = vmatpush1.msra.mxu0 0.0
        %350 = vmatprep.subr.mxu0 0.0
        %351 = vmatpush1.msra.mxu0 0.0
        %352 = vmatprep.subr.mxu0 0.0
        %353 = vmatpush1.msra.mxu0 0.0
        %354 = vmatprep.subr.mxu0 0.0
        %355 = vmatpush1.msra.mxu0 0.0
        %356 = vmatprep.subr.mxu0 0.0
        %357 = vmatpush1.msra.mxu0 0.0
        %358 = vmatprep.subr.mxu0 0.0
        %359 = vmatpush1.msra.mxu0 0.0
        %360 = vmatprep.subr.mxu0 0.0
        %361 = vmatpush1.msra.mxu0 0.0
        %362 = vmatprep.subr.mxu0 0.0
        %363 = vmatpush1.msra.mxu0 0.0
        %364 = vmatprep.subr.mxu0 0.0
        %365 = vmatpush1.msra.mxu0 0.0
        %366 = vmatprep.subr.mxu0 0.0
        %367 = vmatpush1.msra.mxu0 0.0
        %368 = vmatprep.subr.mxu0 0.0
        %369 = vmatpush1.msra.mxu0 0.0
        %370 = vmatprep.mubr.f32.mxu0 0.0
        %371 = vmatmul.mubr.f32.gmra.mrb[0].mxu0 %v304
        %v372 = vpop.f32.mrb[0].mxu0
        %v373 = vadd.f32 %v300, %v372
        %v374 = vpop.f32.mrb[0].mxu0
        %375 = vdwg.mxu0
        %v376 = vtanh.pop %v373
        %vm377 = vcmask 523264
        %v379 = vsel %vm377, %v376, 0
        %381 = vmatprep.subr.mxu0 0.0
        %382 = vmatpush1.msra.mxu0 %v287
        %383 = vmatprep.subr.mxu0 0.0
        %384 = vmatpush1.msra.mxu0 %v288
        %385 = vmatprep.subr.mxu0 0.0
        %386 = vmatpush1.msra.mxu0 %v289
        %387 = vmatprep.subr.mxu0 0.0
        %388 = vmatpush1.msra.mxu0 %v290
        %389 = vmatprep.subr.mxu0 0.0
        %390 = vmatpush1.msra.mxu0 %v291
        %391 = vmatprep.subr.mxu0 0.0
        %392 = vmatpush1.msra.mxu0 %v292
        %393 = vmatprep.subr.mxu0 0.0
        %394 = vmatpush1.msra.mxu0 %v293
        %395 = vmatprep.subr.mxu0 0.0
        %396 = vmatpush1.msra.mxu0 %v294
        %397 = vmatprep.subr.mxu0 0.0
        %398 = vmatpush1.msra.mxu0 0.0
        %399 = vmatprep.subr.mxu0 0.0
        %400 = vmatpush1.msra.mxu0 0.0
        %401 = vmatprep.subr.mxu0 0.0
        %402 = vmatpush1.msra.mxu0 0.0
        %403 = vmatprep.subr.mxu0 0.0
        %404 = vmatpush1.msra.mxu0 0.0
        %405 = vmatprep.subr.mxu0 0.0
        %406 = vmatpush1.msra.mxu0 0.0
        %407 = vmatprep.subr.mxu0 0.0
        %408 = vmatpush1.msra.mxu0 0.0
        %409 = vmatprep.subr.mxu0 0.0
        %410 = vmatpush1.msra.mxu0 0.0
        %411 = vmatprep.subr.mxu0 0.0
        %412 = vmatpush1.msra.mxu0 0.0
        %413 = vmatprep.subr.mxu0 0.0
        %414 = vmatpush1.msra.mxu0 0.0
        %415 = vmatprep.subr.mxu0 0.0
        %416 = vmatpush1.msra.mxu0 0.0
        %417 = vmatprep.subr.mxu0 0.0
        %418 = vmatpush1.msra.mxu0 0.0
        %419 = vmatprep.subr.mxu0 0.0
        %420 = vmatpush1.msra.mxu0 0.0
        %421 = vmatprep.subr.mxu0 0.0
        %422 = vmatpush1.msra.mxu0 0.0
        %423 = vmatprep.subr.mxu0 0.0
        %424 = vmatpush1.msra.mxu0 0.0
        %425 = vmatprep.subr.mxu0 0.0
        %426 = vmatpush1.msra.mxu0 0.0
        %427 = vmatprep.subr.mxu0 0.0
        %428 = vmatpush1.msra.mxu0 0.0
        %429 = vmatprep.subr.mxu0 0.0
        %430 = vmatpush1.msra.mxu0 0.0
        %431 = vmatprep.subr.mxu0 0.0
        %432 = vmatpush1.msra.mxu0 0.0
        %433 = vmatprep.subr.mxu0 0.0
        %434 = vmatpush1.msra.mxu0 0.0
        %435 = vmatprep.subr.mxu0 0.0
        %436 = vmatpush1.msra.mxu0 0.0
        %437 = vmatprep.subr.mxu0 0.0
        %438 = vmatpush1.msra.mxu0 0.0
        %439 = vmatprep.subr.mxu0 0.0
        %440 = vmatpush1.msra.mxu0 0.0
        %441 = vmatprep.subr.mxu0 0.0
        %442 = vmatpush1.msra.mxu0 0.0
        %443 = vmatprep.subr.mxu0 0.0
        %444 = vmatpush1.msra.mxu0 0.0
        %445 = vmatprep.mubr.f32.mxu0 0.0
        %446 = vmatmul.mubr.f32.gmra.mrb[0].mxu0 %v379
        %v447 = vpop.f32.mrb[0].mxu0
        %v448 = vadd.f32 0.0, %v447
        %v449 = vpop.f32.mrb[0].mxu0
        %450 = vdwg.mxu0
        %v451 = vld [vmem:[%s247] sm:$0xff]
        %v453 = vsel %vm302, %v451, 0
        %455 = vmatprep.subr.mxu0 0.0
        %456 = vmatpush1.msra.mxu0 %v282
        %457 = vmatprep.subr.mxu0 0.0
        %458 = vmatpush1.msra.mxu0 %v283
        %459 = vmatprep.subr.mxu0 0.0
        %460 = vmatpush1.msra.mxu0 %v284
        %461 = vmatprep.subr.mxu0 0.0
        %462 = vmatpush1.msra.mxu0 %v285
        %463 = vmatprep.subr.mxu0 0.0
        %464 = vmatpush1.msra.mxu0 0.0
        %465 = vmatprep.subr.mxu0 0.0
        %466 = vmatpush1.msra.mxu0 0.0
        %467 = vmatprep.subr.mxu0 0.0
        %468 = vmatpush1.msra.mxu0 0.0
        %469 = vmatprep.subr.mxu0 0.0
        %470 = vmatpush1.msra.mxu0 0.0
        %471 = vmatprep.subr.mxu0 0.0
        %472 = vmatpush1.msra.mxu0 0.0
        %473 = vmatprep.subr.mxu0 0.0
        %474 = vmatpush1.msra.mxu0 0.0
        %475 = vmatprep.subr.mxu0 0.0
        %476 = vmatpush1.msra.mxu0 0.0
        %477 = vmatprep.subr.mxu0 0.0
        %478 = vmatpush1.msra.mxu0 0.0
        %479 = vmatprep.subr.mxu0 0.0
        %480 = vmatpush1.msra.mxu0 0.0
        %481 = vmatprep.subr.mxu0 0.0
        %482 = vmatpush1.msra.mxu0 0.0
        %483 = vmatprep.subr.mxu0 0.0
        %484 = vmatpush1.msra.mxu0 0.0
        %485 = vmatprep.subr.mxu0 0.0
        %486 = vmatpush1.msra.mxu0 0.0
        %487 = vmatprep.subr.mxu0 0.0
        %488 = vmatpush1.msra.mxu0 0.0
        %489 = vmatprep.subr.mxu0 0.0
        %490 = vmatpush1.msra.mxu0 0.0
        %491 = vmatprep.subr.mxu0 0.0
        %492 = vmatpush1.msra.mxu0 0.0
        %493 = vmatprep.subr.mxu0 0.0
        %494 = vmatpush1.msra.mxu0 0.0
        %495 = vmatprep.subr.mxu0 0.0
        %496 = vmatpush1.msra.mxu0 0.0
        %497 = vmatprep.subr.mxu0 0.0
        %498 = vmatpush1.msra.mxu0 0.0
        %499 = vmatprep.subr.mxu0 0.0
        %500 = vmatpush1.msra.mxu0 0.0
        %501 = vmatprep.subr.mxu0 0.0
        %502 = vmatpush1.msra.mxu0 0.0
        %503 = vmatprep.subr.mxu0 0.0
        %504 = vmatpush1.msra.mxu0 0.0
        %505 = vmatprep.subr.mxu0 0.0
        %506 = vmatpush1.msra.mxu0 0.0
        %507 = vmatprep.subr.mxu0 0.0
        %508 = vmatpush1.msra.mxu0 0.0
        %509 = vmatprep.subr.mxu0 0.0
        %510 = vmatpush1.msra.mxu0 0.0
        %511 = vmatprep.subr.mxu0 0.0
        %512 = vmatpush1.msra.mxu0 0.0
        %513 = vmatprep.subr.mxu0 0.0
        %514 = vmatpush1.msra.mxu0 0.0
        %515 = vmatprep.subr.mxu0 0.0
        %516 = vmatpush1.msra.mxu0 0.0
        %517 = vmatprep.subr.mxu0 0.0
        %518 = vmatpush1.msra.mxu0 0.0
        %519 = vmatprep.mubr.f32.mxu0 0.0
        %520 = vmatmul.mubr.f32.gmra.mrb[0].mxu0 %v453
        %v521 = vpop.f32.mrb[0].mxu0
        %v522 = vadd.f32 %v300, %v521
        %v523 = vpop.f32.mrb[0].mxu0
        %524 = vdwg.mxu0
        %v525 = vtanh.pop %v522
        %v527 = vsel %vm377, %v525, 0
        %529 = vmatprep.subr.mxu0 0.0
        %530 = vmatpush1.msra.mxu0 %v287
        %531 = vmatprep.subr.mxu0 0.0
        %532 = vmatpush1.msra.mxu0 %v288
        %533 = vmatprep.subr.mxu0 0.0
        %534 = vmatpush1.msra.mxu0 %v289
        %535 = vmatprep.subr.mxu0 0.0
        %536 = vmatpush1.msra.mxu0 %v290
        %537 = vmatprep.subr.mxu0 0.0
        %538 = vmatpush1.msra.mxu0 %v291
        %539 = vmatprep.subr.mxu0 0.0
        %540 = vmatpush1.msra.mxu0 %v292
        %541 = vmatprep.subr.mxu0 0.0
        %542 = vmatpush1.msra.mxu0 %v293
        %543 = vmatprep.subr.mxu0 0.0
        %544 = vmatpush1.msra.mxu0 %v294
        %545 = vmatprep.subr.mxu0 0.0
        %546 = vmatpush1.msra.mxu0 0.0
        %547 = vmatprep.subr.mxu0 0.0
        %548 = vmatpush1.msra.mxu0 0.0
        %549 = vmatprep.subr.mxu0 0.0
        %550 = vmatpush1.msra.mxu0 0.0
        %551 = vmatprep.subr.mxu0 0.0
        %552 = vmatpush1.msra.mxu0 0.0
        %553 = vmatprep.subr.mxu0 0.0
        %554 = vmatpush1.msra.mxu0 0.0
        %555 = vmatprep.subr.mxu0 0.0
        %556 = vmatpush1.msra.mxu0 0.0
        %557 = vmatprep.subr.mxu0 0.0
        %558 = vmatpush1.msra.mxu0 0.0
        %559 = vmatprep.subr.mxu0 0.0
        %560 = vmatpush1.msra.mxu0 0.0
        %561 = vmatprep.subr.mxu0 0.0
        %562 = vmatpush1.msra.mxu0 0.0
        %563 = vmatprep.subr.mxu0 0.0
        %564 = vmatpush1.msra.mxu0 0.0
        %565 = vmatprep.subr.mxu0 0.0
        %566 = vmatpush1.msra.mxu0 0.0
        %567 = vmatprep.subr.mxu0 0.0
        %568 = vmatpush1.msra.mxu0 0.0
        %569 = vmatprep.subr.mxu0 0.0
        %570 = vmatpush1.msra.mxu0 0.0
        %571 = vmatprep.subr.mxu0 0.0
        %572 = vmatpush1.msra.mxu0 0.0
        %573 = vmatprep.subr.mxu0 0.0
        %574 = vmatpush1.msra.mxu0 0.0
        %575 = vmatprep.subr.mxu0 0.0
        %576 = vmatpush1.msra.mxu0 0.0
        %577 = vmatprep.subr.mxu0 0.0
        %578 = vmatpush1.msra.mxu0 0.0
        %579 = vmatprep.subr.mxu0 0.0
        %580 = vmatpush1.msra.mxu0 0.0
        %581 = vmatprep.subr.mxu0 0.0
        %582 = vmatpush1.msra.mxu0 0.0
        %583 = vmatprep.subr.mxu0 0.0
        %584 = vmatpush1.msra.mxu0 0.0
        %585 = vmatprep.subr.mxu0 0.0
        %586 = vmatpush1.msra.mxu0 0.0
        %587 = vmatprep.subr.mxu0 0.0
        %588 = vmatpush1.msra.mxu0 0.0
        %589 = vmatprep.subr.mxu0 0.0
        %590 = vmatpush1.msra.mxu0 0.0
        %591 = vmatprep.subr.mxu0 0.0
        %592 = vmatpush1.msra.mxu0 0.0
        %593 = vmatprep.mubr.f32.mxu0 0.0
        %594 = vmatmul.mubr.f32.gmra.mrb[0].mxu0 %v527
        %v595 = vpop.f32.mrb[0].mxu0
        %v596 = vadd.f32 0.0, %v595
        %v597 = vpop.f32.mrb[0].mxu0
        %598 = vdwg.mxu0
        %v599 = vlaneseq
        %v600 = vshrl.u32 %v599, 7
        %v601 = vsub.s32 0, %v600
        %v602 = vrot.slane %v448, %v601
        %v603 = vmax.f32 %v602, %v596
        %v604 = vlaneseq
        %v605 = vshrl.u32 %v604, 7
        %v606 = vsub.s32 1, %v605
        %v607 = vrot.slane %v448, %v606
        %v608 = vmax.f32 %v603, %v607
        %v610 = vrot.slane %v596, 4
        %v612 = vmax.f32 %v608, %v610
        %v613 = vsub.f32 %v602, %v612
        %v614 = vmul.f32 %v613, 1.442695
        %v615 = vpow.pop %v614
        %v616 = vsub.f32 %v596, %v612
        %v617 = vmul.f32 %v616, 1.442695
        %v618 = vpow.pop %v617
        %v619 = vadd.f32 %v615, 0.0
        %v620 = vadd.f32 %v619, %v618
        %v621 = vsub.f32 %v607, %v612
        %v622 = vmul.f32 %v621, 1.442695
        %v623 = vpow.pop %v622
        %v625 = vrot.slane %v612, 4
        %v627 = vsub.f32 %v596, %v625
        %v628 = vmul.f32 %v627, 1.442695
        %v629 = vpow.pop %v628
        %v630 = vadd.f32 %v620, %v623
        %v632 = vrot.slane %v629, 4
        %v634 = vadd.f32 %v630, %v632
        %v635 = vrcp.pop %v634
        %v636 = vmul.f32 %v634, %v635
        %v637 = vsub.f32 2.0, %v636
        %v638 = vmul.f32 %v635, %v637
        %v639 = vmul.f32 %v615, %v638
        %vm640 = vcmask 519168
        %641 = vst.msk [vmem:[%s281] sm:$0xf] %vm640, %v639
        %v642 = vmul.f32 %v618, %v638
        %s643 = scalar_lea.vmem %s281, 8 [#allocation10]
        %644 = vst.msk [vmem:[%s643] sm:$0xf] %vm640, %v642
        %v645 = vmul.f32 %v623, %v638
        %s646 = scalar_lea.vmem %s281, 4 [#allocation10]
        %647 = vst.msk [vmem:[%s646] sm:$0xf] %vm640, %v645
        %v649 = vrot.slane %v638, 4
        %v651 = vmul.f32 %v629, %v649
        %s652 = scalar_lea.vmem %s281, 12 [#allocation10]
        %vm653 = vcmask 523268
        %654 = vst.msk [vmem:[%s652 - $0x4] sm:$0xf0] %vm653, %v651
        %s655 = sand.u32 %s142, 1
        %s656 = scalar_lea.sflag [#allocation4], %s655
        %s657 = sand.u32 %s142, 1
        %s658 = smul.addr %s657, 16
        %s659 = scalar_lea.vmem [#allocation10], %s658
        // Predicated region
        $region57: #{tpu_custom_call.1} parent=39 // pred_check
          %p660 = pneg %p152
        $region58: #{tpu_custom_call.1} parent=39 // pred_check_branch
          %662 = sbr.rel (%p660) target = $region60
        $region59: #{tpu_custom_call.1} parent=39 // pred_region
          %s664 = ssub.s32 256, 256
          %665 = vsyncadd %s656, %s664
          %s666 = smul.addr %s24, 4
          %s667 = smul.addr %s666, 64
          %s668 = scalar_lea.hbm %s5, %s667
          %s669 = sshll.u32 %s659, 4
          %s670 = int_to_ptr.vmem [resolvable:$true] %s669
          %675 = dma.vmem_to_hbm [thread:$0]  %s670, 256, %s668, %s656, 64, 64, 4
        $region60: #{tpu_custom_call.1} parent=39 // pred_fallthru
          _
      $region40: #{tpu_custom_call.1} parent=5 // pred_fallthru
        _
      %p676 = scmp.le.s32.totalorder 2, %s19
      // Predicated region
      $region61: #{tpu_custom_call.1} parent=5 // pred_check
        %p677 = pneg %p676
      $region62: #{tpu_custom_call.1} parent=5 // pred_check_branch
        %679 = sbr.rel (%p677) target = $region64
      $region63: #{tpu_custom_call.1} parent=5 // pred_region
        %s680 = ssub.s32 %s19, 2
        // Predicated region
        $region65: #{tpu_custom_call.1} parent=63 // pred_check
          %p681 = pneg %p158
        $region66: #{tpu_custom_call.1} parent=63 // pred_check_branch
          %683 = sbr.rel (%p681) target = $region68
        $region67: #{tpu_custom_call.1} parent=63 // pred_region
          %s684 = sand.u32 %s143, 1
          %s685 = scalar_lea.sflag [#allocation4], %s684
          %s686 = sand.u32 %s143, 1
          %s687 = smul.addr %s686, 16
          %s688 = scalar_lea.vmem [#allocation10], %s687
          %689 = dma.done %s685, 256
        $region68: #{tpu_custom_call.1} parent=63 // pred_fallthru
          _
      $region64: #{tpu_custom_call.1} parent=5 // pred_fallthru
        _
    $region6: #{tpu_custom_call.1} parent=1 // loop_footer
      %s23 = sadd.s32 1, %s19
    $region7: #{tpu_custom_call.1} parent=1 // loop_footer_branch
      %18 = sbr.rel target = $region3
    $region8: #{tpu_custom_call.1} parent=1 // loop_exit
      _
    %690 = vsyncpa [#allocation3], 1
    %s691 = scalar_lea.sflag [#allocation3], 1
    %692 = vsyncpa %s691, 1
    %693 = vsyncpa [#allocation6], 1
    %s694 = scalar_lea.sflag [#allocation6], 1
    %695 = vsyncpa %s694, 1
    %696 = vsyncpa [#allocation9], 1
    %697 = vsyncpa [#allocation4], 1
    %s698 = scalar_lea.sflag [#allocation4], 1
    %699 = vsyncpa %s698, 1

</llo_original>
